<compile_context>
chip_gen: v7x
topology: tpu7x:2x2x1
jax: 0.10.0
libtpu: 0.0.40
codegen_flags: <defaults>
</compile_context>

<pallas_src>
import functools

import jax
import jax.numpy as jnp
from jax import lax
from jax.experimental import pallas as pl
from jax.experimental.pallas import tpu as pltpu


def _self_attention_kernel(x_ref, wqkv_ref, wproj_ref, bproj_ref, o_ref, *,
                           num_tokens, dim, heads, head_dims):
    """One grid step == one batch sample.

    x_ref     : (N, D)    VMEM, activation dtype (f32 or bf16)
    wqkv_ref  : (D, 3D)   VMEM, activation dtype
    wproj_ref : (D, D)    VMEM, activation dtype
    bproj_ref : (1, D)    VMEM, f32
    o_ref     : (N, D)    VMEM, activation dtype
    """
    N, D, H, Hd = num_tokens, dim, heads, head_dims
    in_dtype = x_ref.dtype
    scale = Hd ** (-0.5)

    x = x_ref[...]                                                  # (N, D)

    # Fused qkv projection: (N, D) @ (D, 3D) -> (N, 3D), f32 accumulator (MXU).
    qkv = jnp.dot(x, wqkv_ref[...], preferred_element_type=jnp.float32)

    # Fold 1/sqrt(head_dims) into q (cheaper than scaling the (N, N) scores).
    q = qkv[:, 0 * D:1 * D] * scale                                 # (N, D) f32
    k = qkv[:, 1 * D:2 * D]                                         # (N, D) f32
    v = qkv[:, 2 * D:3 * D]                                         # (N, D) f32

    # ---- all heads at once: block-diagonal trick, two dense 2-D matmuls ----
    # head_mask[h, 0, d] = 1.0 iff feature column d belongs to head h.
    h_idx = lax.broadcasted_iota(jnp.int32, (H, 1, D), 0)
    d_idx = lax.broadcasted_iota(jnp.int32, (H, 1, D), 2)
    lo = h_idx * Hd
    head_mask = ((d_idx >= lo) & (d_idx < lo + Hd)).astype(jnp.float32)

    # q_blk[h*N + n, d] = q[n, d] if column d belongs to head h else 0, so
    # row-block h of (q_blk contracted with k over d) equals q_h @ k_h^T
    # exactly — the zeroed cross-head features contribute nothing.
    q_blk = (head_mask * q).reshape(H * N, D)       # leading-dim merge only

    # Scores for every head in a single MXU matmul: (H*N, N), f32 accumulate.
    s = jnp.einsum('xd,nd->xn',
                   q_blk.astype(in_dtype), k.astype(in_dtype),
                   preferred_element_type=jnp.float32)

    # Numerically stable softmax over keys (f32; exp + approx recip on EUP).
    s = s - jnp.max(s, axis=-1, keepdims=True)
    p = jnp.exp(s)
    p = p * pl.reciprocal(jnp.sum(p, axis=-1, keepdims=True), approx=True)

    # TODO(synk): attention dropout (p=0.2) is identity here (eval mode only).

    # attn @ v for every head in one matmul: (H*N, N) @ (N, D) -> (H*N, D).
    # In row-block h only the head-h column slice is meaningful (= p_h @ v_h).
    o_all = jnp.dot(p.astype(in_dtype), v.astype(in_dtype),
                    preferred_element_type=jnp.float32)
    # Select each head's own feature slice and merge heads back to (N, D)
    # (== transpose(1, 2).flatten(2) in the PyTorch module).
    attn = jnp.sum(o_all.reshape(H, N, D) * head_mask, axis=0)      # (N, D) f32

    # Output projection: (N, D) @ (D, D) + bias, f32 accumulate.
    out = jnp.dot(attn.astype(in_dtype), wproj_ref[...],
                  preferred_element_type=jnp.float32)
    out = out + bproj_ref[...]
    o_ref[...] = out.astype(o_ref.dtype)


def self_attention(x, w_qkv, w_proj, b_proj, *, heads):
    """Forward pass of the PyTorch SelfAttention module (eval mode).

    x: (B, N, D); w_qkv: (D, 3D); w_proj: (D, D); b_proj: (D,).
    """
    B, N, D = x.shape
    assert D % heads == 0, (D, heads)
    head_dims = D // heads

    # Weights in the activation dtype: a bf16 model gets bf16 MXU operands
    # (f32 accumulation preserved inside the kernel); the f32 demo stays exact.
    w_qkv = w_qkv.astype(x.dtype)
    w_proj = w_proj.astype(x.dtype)
    b_proj2d = b_proj.reshape(1, D).astype(jnp.float32)

    kernel = functools.partial(
        _self_attention_kernel,
        num_tokens=N, dim=D, heads=heads, head_dims=head_dims)

    return pl.pallas_call(
        kernel,
        out_shape=jax.ShapeDtypeStruct((B, N, D), x.dtype),
        grid_spec=pltpu.PrefetchScalarGridSpec(
            num_scalar_prefetch=0,
            grid=(B,),  # one sample per step; ≥2-wide parallel axis for v7x's 2 TCs
            in_specs=[
                pl.BlockSpec((None, N, D), lambda b: (b, 0, 0)),   # x (sample b)
                pl.BlockSpec((D, 3 * D), lambda b: (0, 0)),        # qkv weight (reused)
                pl.BlockSpec((D, D), lambda b: (0, 0)),            # proj weight (reused)
                pl.BlockSpec((1, D), lambda b: (0, 0)),            # proj bias (reused)
            ],
            out_specs=pl.BlockSpec((None, N, D), lambda b: (b, 0, 0)),
        ),
        compiler_params=pltpu.CompilerParams(
            dimension_semantics=("parallel",)),
    )(x, w_qkv, w_proj, b_proj2d)


if __name__ == "__main__":
    # Small shapes consistent with the module: batch=2, tokens=8, dim=32, heads=4.
    B, N, DIM, HEADS = 2, 8, 32, 4
    HD = DIM // HEADS

    key = jax.random.PRNGKey(0)
    k_x, k_qkv, k_pw, k_pb = jax.random.split(key, 4)

    x = jax.random.normal(k_x, (B, N, DIM), dtype=jnp.float32)
    w_qkv_t = jax.random.normal(k_qkv, (DIM, 3 * DIM), dtype=jnp.float32) * 0.05
    w_proj_t = jax.random.normal(k_pw, (DIM, DIM), dtype=jnp.float32) * 0.05
    b_proj = jax.random.normal(k_pb, (DIM,), dtype=jnp.float32) * 0.01

    out = self_attention(x, w_qkv_t, w_proj_t, b_proj, heads=HEADS)
    jax.block_until_ready(out)

    # Pure-JAX reference mirroring the PyTorch forward (dropout = eval mode).
    def ref(xv):
        qkv = xv @ w_qkv_t                                    # (B, N, 3D)
        qkv = qkv.reshape(B, N, 3, HEADS, HD)
        qkv = jnp.transpose(qkv, (2, 0, 3, 1, 4))
        q, kk, vv = qkv[0], qkv[1], qkv[2]                    # (B, H, N, Hd)
        s = jnp.einsum('bhnd,bhmd->bhnm', q, kk) * (HD ** -0.5)
        p = jax.nn.softmax(s, axis=-1)
        o = jnp.einsum('bhnm,bhmd->bhnd', p, vv)
        o = jnp.transpose(o, (0, 2, 1, 3)).reshape(B, N, DIM)
        return o @ w_proj_t + b_proj

    expected = ref(x)
    assert out.shape == (B, N, DIM), out.shape
    assert jnp.all(jnp.isfinite(out))
    assert jnp.allclose(out, expected, rtol=2e-2, atol=2e-2), (
        float(jnp.max(jnp.abs(out - expected))))
    print("KERNEL_OK")
</pallas_src>

<mosaic_0001>
module attributes {stable_mosaic.version = 11 : i64} {
  func.func @_self_attention_kernel(%arg0: i32, %arg1: memref<1x8x32xf32, #tpu.memory_space<vmem>>, %arg2: memref<32x96xf32, #tpu.memory_space<vmem>>, %arg3: memref<32x32xf32, #tpu.memory_space<vmem>>, %arg4: memref<1x32xf32, #tpu.memory_space<vmem>>, %arg5: memref<1x8x32xf32, #tpu.memory_space<vmem>>) attributes {dimension_semantics = [#tpu.dimension_semantics<parallel>], iteration_bounds = array<i64: 2>, scalar_prefetch = 0 : i64, scratch_operands = 0 : i64, tpu.core_type = #tpu.core_type<tc>, window_params = [{transform_indices = @transform_0, window_bounds = array<i64: 1, 8, 32>}, {pipeline_mode = #tpu.pipeline_mode<synchronous>, transform_indices = @transform_1, window_bounds = array<i64: 32, 96>}, {pipeline_mode = #tpu.pipeline_mode<synchronous>, transform_indices = @transform_2, window_bounds = array<i64: 32, 32>}, {pipeline_mode = #tpu.pipeline_mode<synchronous>, transform_indices = @transform_3, window_bounds = array<i64: 1, 32>}, {transform_indices = @transform_4, window_bounds = array<i64: 1, 8, 32>}]} {
    %c0 = arith.constant 0 : index
    %c0_0 = arith.constant 0 : index
    %c0_1 = arith.constant 0 : index
    %0 = vector.load %arg1[%c0, %c0_0, %c0_1] : memref<1x8x32xf32, #tpu.memory_space<vmem>>, vector<1x8x32xf32>
    %1 = vector.shape_cast %0 : vector<1x8x32xf32> to vector<8x32xf32>
    %c0_2 = arith.constant 0 : index
    %c0_3 = arith.constant 0 : index
    %2 = vector.load %arg2[%c0_2, %c0_3] : memref<32x96xf32, #tpu.memory_space<vmem>>, vector<32x96xf32>
    %cst = arith.constant dense<0.000000e+00> : vector<8x96xf32>
    %3 = tpu.matmul %1, %2, %cst {dimension_numbers = #tpu.dot_dimension_numbers<[1], [0], [0], [1], [0, 0, 1, 1], [], []>} : vector<8x32xf32>, vector<32x96xf32>, vector<8x96xf32> -> vector<8x96xf32>
    %4 = vector.extract_strided_slice %3 {offsets = [0, 0], sizes = [8, 32], strides = [1, 1]} : vector<8x96xf32> to vector<8x32xf32>
    %cst_4 = arith.constant 0.353553385 : f32
    %5 = vector.broadcast %cst_4 : f32 to vector<8x32xf32>
    %6 = arith.mulf %4, %5 : vector<8x32xf32>
    %7 = vector.extract_strided_slice %3 {offsets = [0, 32], sizes = [8, 32], strides = [1, 1]} : vector<8x96xf32> to vector<8x32xf32>
    %8 = vector.extract_strided_slice %3 {offsets = [0, 64], sizes = [8, 32], strides = [1, 1]} : vector<8x96xf32> to vector<8x32xf32>
    %9 = tpu.iota {dimensions = array<i32: 0>} : vector<4x1x32xi32>
    %10 = tpu.iota {dimensions = array<i32: 2>} : vector<4x1x32xi32>
    %c8_i32 = arith.constant 8 : i32
    %11 = vector.broadcast %c8_i32 : i32 to vector<4x1x32xi32>
    %12 = arith.muli %9, %11 : vector<4x1x32xi32>
    %13 = arith.cmpi sge, %10, %12 : vector<4x1x32xi32>
    %c8_i32_5 = arith.constant 8 : i32
    %14 = vector.broadcast %c8_i32_5 : i32 to vector<4x1x32xi32>
    %15 = arith.addi %12, %14 : vector<4x1x32xi32>
    %16 = arith.cmpi slt, %10, %15 : vector<4x1x32xi32>
    %17 = arith.andi %13, %16 : vector<4x1x32xi1>
    %18 = arith.extui %17 : vector<4x1x32xi1> to vector<4x1x32xi32>
    %19 = arith.sitofp %18 : vector<4x1x32xi32> to vector<4x1x32xf32>
    %20 = vector.shape_cast %6 : vector<8x32xf32> to vector<1x8x32xf32>
    %21 = vector.broadcast %19 : vector<4x1x32xf32> to vector<4x8x32xf32>
    %22 = vector.broadcast %20 : vector<1x8x32xf32> to vector<4x8x32xf32>
    %23 = arith.mulf %21, %22 : vector<4x8x32xf32>
    %24 = vector.shape_cast %23 : vector<4x8x32xf32> to vector<32x32xf32>
    "tpu.trace_start"() <{level = 10 : i32, message = "xd,nd->xn"}> : () -> ()
    %cst_6 = arith.constant dense<0.000000e+00> : vector<32x8xf32>
    %25 = tpu.matmul %24, %7, %cst_6 {dimension_numbers = #tpu.dot_dimension_numbers<[1], [1], [0], [0], [0, 0, 1, 0], [], []>} : vector<32x32xf32>, vector<8x32xf32>, vector<32x8xf32> -> vector<32x8xf32>
    "tpu.trace_stop"() : () -> ()
    %cst_7 = arith.constant dense<0xFF800000> : vector<32xf32>
    %26 = vector.multi_reduction <maximumf>, %25, %cst_7 [1] : vector<32x8xf32> to vector<32xf32>
    %27 = vector.shape_cast %26 : vector<32xf32> to vector<32x1xf32>
    %28 = vector.broadcast %27 : vector<32x1xf32> to vector<32x8xf32>
    %29 = arith.subf %25, %28 : vector<32x8xf32>
    %30 = math.exp %29 : vector<32x8xf32>
    %cst_8 = arith.constant dense<0.000000e+00> : vector<32xf32>
    %31 = vector.multi_reduction <add>, %30, %cst_8 [1] : vector<32x8xf32> to vector<32xf32>
    %32 = vector.shape_cast %31 : vector<32xf32> to vector<32x1xf32>
    %33 = tpu.reciprocal %32 {approx = true} : vector<32x1xf32> -> vector<32x1xf32>
    %34 = vector.broadcast %33 : vector<32x1xf32> to vector<32x8xf32>
    %35 = arith.mulf %30, %34 : vector<32x8xf32>
    %cst_9 = arith.constant dense<0.000000e+00> : vector<32x32xf32>
    %36 = tpu.matmul %35, %8, %cst_9 {dimension_numbers = #tpu.dot_dimension_numbers<[1], [0], [0], [1], [0, 0, 1, 1], [], []>} : vector<32x8xf32>, vector<8x32xf32>, vector<32x32xf32> -> vector<32x32xf32>
    %37 = vector.shape_cast %36 : vector<32x32xf32> to vector<4x8x32xf32>
    %38 = vector.broadcast %19 : vector<4x1x32xf32> to vector<4x8x32xf32>
    %39 = arith.mulf %37, %38 : vector<4x8x32xf32>
    %cst_10 = arith.constant dense<0.000000e+00> : vector<8x32xf32>
    %40 = vector.multi_reduction <add>, %39, %cst_10 [0] : vector<4x8x32xf32> to vector<8x32xf32>
    %c0_11 = arith.constant 0 : index
    %c0_12 = arith.constant 0 : index
    %41 = vector.load %arg3[%c0_11, %c0_12] : memref<32x32xf32, #tpu.memory_space<vmem>>, vector<32x32xf32>
    %cst_13 = arith.constant dense<0.000000e+00> : vector<8x32xf32>
    %42 = tpu.matmul %40, %41, %cst_13 {dimension_numbers = #tpu.dot_dimension_numbers<[1], [0], [0], [1], [0, 0, 1, 1], [], []>} : vector<8x32xf32>, vector<32x32xf32>, vector<8x32xf32> -> vector<8x32xf32>
    %c0_14 = arith.constant 0 : index
    %c0_15 = arith.constant 0 : index
    %43 = vector.load %arg4[%c0_14, %c0_15] : memref<1x32xf32, #tpu.memory_space<vmem>>, vector<1x32xf32>
    %44 = vector.broadcast %43 : vector<1x32xf32> to vector<8x32xf32>
    %45 = arith.addf %42, %44 : vector<8x32xf32>
    %c0_16 = arith.constant 0 : index
    %c0_17 = arith.constant 0 : index
    %c0_18 = arith.constant 0 : index
    %46 = vector.load %arg5[%c0_16, %c0_17, %c0_18] : memref<1x8x32xf32, #tpu.memory_space<vmem>>, vector<1x8x32xf32>
    %47 = vector.shape_cast %46 : vector<1x8x32xf32> to vector<8x32xf32>
    %48 = vector.shape_cast %45 : vector<8x32xf32> to vector<1x8x32xf32>
    tpu.vector_store %arg5[%c0_16, %c0_17, %c0_18], %48 {strides = array<i32>} : memref<1x8x32xf32, #tpu.memory_space<vmem>>, vector<1x8x32xf32>,
    return
  }
  func.func @transform_0(%arg0: i32) -> (i32, i32, i32) {
    %c0_i32 = arith.constant 0 : i32
    %c0_i32_0 = arith.constant 0 : i32
    %c0_i32_1 = arith.constant 0 : i32
    return %arg0, %c0_i32, %c0_i32_0 : i32, i32, i32
  }
  func.func @transform_1(%arg0: i32) -> (i32, i32) {
    %c0_i32 = arith.constant 0 : i32
    %c0_i32_0 = arith.constant 0 : i32
    %c0_i32_1 = arith.constant 0 : i32
    return %c0_i32, %c0_i32_0 : i32, i32
  }
  func.func @transform_2(%arg0: i32) -> (i32, i32) {
    %c0_i32 = arith.constant 0 : i32
    %c0_i32_0 = arith.constant 0 : i32
    %c0_i32_1 = arith.constant 0 : i32
    return %c0_i32, %c0_i32_0 : i32, i32
  }
  func.func @transform_3(%arg0: i32) -> (i32, i32) {
    %c0_i32 = arith.constant 0 : i32
    %c0_i32_0 = arith.constant 0 : i32
    %c0_i32_1 = arith.constant 0 : i32
    return %c0_i32, %c0_i32_0 : i32, i32
  }
  func.func @transform_4(%arg0: i32) -> (i32, i32, i32) {
    %c0_i32 = arith.constant 0 : i32
    %c0_i32_0 = arith.constant 0 : i32
    %c0_i32_1 = arith.constant 0 : i32
    return %arg0, %c0_i32, %c0_i32_0 : i32, i32, i32
  }
}

</mosaic_0001>

<llo_original>
// kernel: tpu_custom_call.1
$region0: #{tpu_custom_call.1}
  #allocation0 [shape = 'u32[]', space=smem, size = 0x4, offset = 0x4, fixed_abs, tag = 'smem constant byte address 0x4 - core index']
  #allocation1 [shape = 'u32[144,128]{1,0:T(1,128)}', space=vmem, size = 0x12000, scoped, tag = 'internal scratch']
  %s0 = inlined_call_operand.hbm [shape: f32[2,8,32], index: 0, kind: input, shape index: {}]
  %s1 = inlined_call_operand.hbm [shape: f32[32,96], index: 1, kind: input, shape index: {}]
  %s2 = inlined_call_operand.hbm [shape: f32[32,32], index: 2, kind: input, shape index: {}]
  %s3 = inlined_call_operand.vmem [shape: f32[1,32], index: 3, kind: input, shape index: {}]
  %s4 = inlined_call_operand.hbm [shape: f32[2,8,32], index: 4, kind: output, shape index: {}]
  %s5 = sld [smem:[#allocation0]]
  $region61: #{tpu_custom_call.1} parent=0
    _
  %s7 = ssub.s32 1, %s5
  %s8 = scalar_select 0, %s7, %s5
  $region1: #{tpu_custom_call.1} parent=0
    #allocation2 [shape = 'u8[8192]{0}', space=vmem, size = 0x2000, scoped, tag = 'input window, operand 0']
    #allocation3 [shape = 's32[2]{0}', space=sflag, size = 0x8, scoped, tag = 'scoped memory for tpu_custom_call.1']
    #allocation4 [shape = 's32[2]{0}', space=sflag, size = 0x8, scoped, tag = 'scoped memory for tpu_custom_call.1']
    #allocation5 [shape = 'u8[16384]{0}', space=vmem, size = 0x4000, scoped, tag = 'input window, operand 1, single buffered']
    #allocation6 [shape = 's32[1]{0}', space=sflag, size = 0x4, scoped, tag = 'scoped memory for tpu_custom_call.1']
    #allocation7 [shape = 'u8[16384]{0}', space=vmem, size = 0x4000, scoped, tag = 'input window, operand 2, single buffered']
    #allocation8 [shape = 'u8[8192]{0}', space=vmem, size = 0x2000, scoped, tag = 'output window, operand 0']
    %9 = vsyncpa [#allocation3], 0
    %s10 = scalar_lea.sflag [#allocation3], 1
    %11 = vsyncpa %s10, 0
    %12 = vsyncpa [#allocation6], 0
    %13 = vsyncpa [#allocation4], 0
    %s14 = scalar_lea.sflag [#allocation4], 1
    %15 = vsyncpa %s14, 0
    loop: start=0, step=1, limit=4
    $region2: #{tpu_custom_call.1} parent=1 // loop_pre_header
      _
    $region3: #{tpu_custom_call.1} parent=1 // loop_header
      %s17 = sphi 0, %s21
      %p18 = scmp.ge.s32.totalorder %s17, 4
      %s27 = sphi 0, %s29
      %s30 = sphi 0, %s27
      %s31 = sphi 0, %s30
      %s47 = sphi 0, %s31
      %s51 = sphi 0, %s51
      %s53 = sphi 0, %s51
      %s54 = sphi 0, %s53
      %s68 = sphi 0, %s54
      %s72 = sphi 0, %s72
      %s74 = sphi 0, %s72
      %s75 = sphi 0, %s74
      %s89 = sphi 0, %s75
      %s93 = sphi 0, %s93
      %s95 = sphi 0, %s93
      %s96 = sphi 0, %s95
      %s110 = sphi 0, %s96
      %s116 = sphi 0, %s118
      %s119 = sphi 0, %s116
      %s120 = sphi 0, %s119
      %s136 = sphi 0, %s120
    $region4: #{tpu_custom_call.1} parent=1 // loop_header_branch
      %20 = sbr.rel (%p18) target = $region8
    $region5: #{tpu_custom_call.1} parent=1 // loop_body
      %s22 = ssub.s32 %s17, 1
      %s23 = ssub.s32 %s17, 2
      %s24 = sadd.s32 %s17, 1
      %s25 = ssub.s32 %s17, %s24
      %p26 = scmp.eq.s32.totalorder %s25, 0
      %s28 = sadd.s32 %s27, 1
      %s29 = scalar_select %p26, %s27, %s28
      %p32 = pneg %p26
      %p33 = scmp.eq.s32.totalorder %s17, 1
      %p34 = por %p32, %p33
      %p35 = scmp.ne.s32.totalorder %s27, %s30
      %p36 = scmp.eq.s32.totalorder %s17, 0
      %p37 = por %p35, %p36
      %p38 = scmp.ne.s32.totalorder %s27, %s30
      %p39 = scmp.eq.s32.totalorder %s22, 1
      %p40 = por %p38, %p39
      %p41 = scmp.ne.s32.totalorder %s30, %s31
      %p42 = scmp.eq.s32.totalorder %s22, 0
      %p43 = por %p41, %p42
      %p44 = scmp.ne.s32.totalorder %s30, %s31
      %p45 = scmp.eq.s32.totalorder %s23, 1
      %p46 = por %p44, %p45
      %p48 = scmp.ne.s32.totalorder %s31, %s47
      %p49 = scmp.eq.s32.totalorder %s23, 0
      %p50 = por %p48, %p49
      %s52 = sadd.s32 %s51, 1
      %p55 = scmp.eq.s32.totalorder %s17, 1
      %p56 = scmp.ne.s32.totalorder %s51, %s53
      %p57 = scmp.eq.s32.totalorder %s17, 0
      %p58 = por %p56, %p57
      %p59 = scmp.ne.s32.totalorder %s51, %s53
      %p60 = scmp.eq.s32.totalorder %s22, 1
      %p61 = por %p59, %p60
      %p62 = scmp.ne.s32.totalorder %s53, %s54
      %p63 = scmp.eq.s32.totalorder %s22, 0
      %p64 = por %p62, %p63
      %p65 = scmp.ne.s32.totalorder %s53, %s54
      %p66 = scmp.eq.s32.totalorder %s23, 1
      %p67 = por %p65, %p66
      %p69 = scmp.ne.s32.totalorder %s54, %s68
      %p70 = scmp.eq.s32.totalorder %s23, 0
      %p71 = por %p69, %p70
      %s73 = sadd.s32 %s72, 1
      %p76 = scmp.eq.s32.totalorder %s17, 1
      %p77 = scmp.ne.s32.totalorder %s72, %s74
      %p78 = scmp.eq.s32.totalorder %s17, 0
      %p79 = por %p77, %p78
      %p80 = scmp.ne.s32.totalorder %s72, %s74
      %p81 = scmp.eq.s32.totalorder %s22, 1
      %p82 = por %p80, %p81
      %p83 = scmp.ne.s32.totalorder %s74, %s75
      %p84 = scmp.eq.s32.totalorder %s22, 0
      %p85 = por %p83, %p84
      %p86 = scmp.ne.s32.totalorder %s74, %s75
      %p87 = scmp.eq.s32.totalorder %s23, 1
      %p88 = por %p86, %p87
      %p90 = scmp.ne.s32.totalorder %s75, %s89
      %p91 = scmp.eq.s32.totalorder %s23, 0
      %p92 = por %p90, %p91
      %s94 = sadd.s32 %s93, 1
      %p97 = scmp.eq.s32.totalorder %s17, 1
      %p98 = scmp.ne.s32.totalorder %s93, %s95
      %p99 = scmp.eq.s32.totalorder %s17, 0
      %p100 = por %p98, %p99
      %p101 = scmp.ne.s32.totalorder %s93, %s95
      %p102 = scmp.eq.s32.totalorder %s22, 1
      %p103 = por %p101, %p102
      %p104 = scmp.ne.s32.totalorder %s95, %s96
      %p105 = scmp.eq.s32.totalorder %s22, 0
      %p106 = por %p104, %p105
      %p107 = scmp.ne.s32.totalorder %s95, %s96
      %p108 = scmp.eq.s32.totalorder %s23, 1
      %p109 = por %p107, %p108
      %p111 = scmp.ne.s32.totalorder %s96, %s110
      %p112 = scmp.eq.s32.totalorder %s23, 0
      %p113 = por %p111, %p112
      %s114 = ssub.s32 %s17, %s24
      %p115 = scmp.eq.s32.totalorder %s114, 0
      %s117 = sadd.s32 %s116, 1
      %s118 = scalar_select %p115, %s116, %s117
      %p121 = pneg %p115
      %p122 = scmp.eq.s32.totalorder %s17, 1
      %p123 = por %p121, %p122
      %p124 = scmp.ne.s32.totalorder %s116, %s119
      %p125 = scmp.eq.s32.totalorder %s17, 0
      %p126 = por %p124, %p125
      %p127 = scmp.ne.s32.totalorder %s116, %s119
      %p128 = scmp.eq.s32.totalorder %s22, 1
      %p129 = por %p127, %p128
      %p130 = scmp.ne.s32.totalorder %s119, %s120
      %p131 = scmp.eq.s32.totalorder %s22, 0
      %p132 = por %p130, %p131
      %p133 = scmp.ne.s32.totalorder %s119, %s120
      %p134 = scmp.eq.s32.totalorder %s23, 1
      %p135 = por %p133, %p134
      %p137 = scmp.ne.s32.totalorder %s120, %s136
      %p138 = scmp.eq.s32.totalorder %s23, 0
      %p139 = por %p137, %p138
      %p140 = scmp.le.s32.totalorder 1, %s17
      %p141 = scmp.lt.s32.totalorder %s17, 3
      %p142 = pnand %p140, %p141
      %p143 = pneg %p142
      // Predicated region
      $region9: #{tpu_custom_call.1} parent=5 // pred_check
        _
      $region10: #{tpu_custom_call.1} parent=5 // pred_check_branch
        %145 = sbr.rel (%p142) target = $region12
      $region11: #{tpu_custom_call.1} parent=5 // pred_region
        %s146 = ssub.s32 %s17, 1
        // Predicated region
        $region13: #{tpu_custom_call.1} parent=11 // pred_check
          %p147 = pneg %p64
        $region14: #{tpu_custom_call.1} parent=11 // pred_check_branch
          %149 = sbr.rel (%p147) target = $region16
        $region15: #{tpu_custom_call.1} parent=11 // pred_region
          %s151 = ssub.s32 512, 512
          %152 = vsyncadd [#allocation6], %s151
          %s153 = sshll.u32 [#allocation5], 4
          %s154 = int_to_ptr.vmem [resolvable:$true] %s153
          %159 = dma.hbm_to_vmem [thread:$0]  %s1, 512, %s154, [#allocation6], 128, 128, 8
        $region16: #{tpu_custom_call.1} parent=11 // pred_fallthru
          _
        // Predicated region
        $region17: #{tpu_custom_call.1} parent=11 // pred_check
          %p160 = pneg %p85
        $region18: #{tpu_custom_call.1} parent=11 // pred_check_branch
          %162 = sbr.rel (%p160) target = $region20
        $region19: #{tpu_custom_call.1} parent=11 // pred_region
          %s164 = ssub.s32 512, 512
          %165 = vsyncadd [#allocation6], %s164
          %s166 = sshll.u32 [#allocation7], 4
          %s167 = int_to_ptr.vmem [resolvable:$true] %s166
          %172 = dma.hbm_to_vmem [thread:$0]  %s2, 512, %s167, [#allocation6], 128, 128, 8
        $region20: #{tpu_custom_call.1} parent=11 // pred_fallthru
          _
        // Predicated region
        $region21: #{tpu_custom_call.1} parent=11 // pred_check
          %p173 = pneg %p106
        $region22: #{tpu_custom_call.1} parent=11 // pred_check_branch
          %175 = sbr.rel (%p173) target = $region24
        $region23: #{tpu_custom_call.1} parent=11 // pred_region
          _
        $region24: #{tpu_custom_call.1} parent=11 // pred_fallthru
          _
      $region12: #{tpu_custom_call.1} parent=5 // pred_fallthru
        _
      %p176 = scmp.lt.s32.totalorder %s17, 2
      // Predicated region
      $region25: #{tpu_custom_call.1} parent=5 // pred_check
        %p177 = pneg %p176
      $region26: #{tpu_custom_call.1} parent=5 // pred_check_branch
        %179 = sbr.rel (%p177) target = $region28
      $region27: #{tpu_custom_call.1} parent=5 // pred_region
        // Predicated region
        $region29: #{tpu_custom_call.1} parent=27 // pred_check
          %p180 = pneg %p37
        $region30: #{tpu_custom_call.1} parent=27 // pred_check_branch
          %182 = sbr.rel (%p180) target = $region32
        $region31: #{tpu_custom_call.1} parent=27 // pred_region
          %s183 = sand.u32 %s27, 1
          %s184 = scalar_lea.sflag [#allocation3], %s183
          %s185 = sand.u32 %s27, 1
          %s186 = smul.addr %s185, 8
          %s187 = scalar_lea.vmem [#allocation2], %s186
          %s189 = ssub.s32 128, 128
          %190 = vsyncadd %s184, %s189
          %s191 = smul.addr %s17, 128
          %s192 = scalar_lea.hbm %s0, %s191
          %s194 = sshll.u32 %s187, 4
          %s195 = int_to_ptr.vmem [resolvable:$true] %s194
          %197 = dma.hbm_to_vmem [thread:$0]  %s192, 128, %s195, %s184
        $region32: #{tpu_custom_call.1} parent=27 // pred_fallthru
          _
      $region28: #{tpu_custom_call.1} parent=5 // pred_fallthru
        _
      %p198 = scmp.le.s32.totalorder 1, %s17
      %p199 = scmp.lt.s32.totalorder %s17, 3
      %p200 = pnand %p198, %p199
      %p201 = pneg %p200
      // Predicated region
      $region33: #{tpu_custom_call.1} parent=5 // pred_check
        _
      $region34: #{tpu_custom_call.1} parent=5 // pred_check_branch
        %203 = sbr.rel (%p200) target = $region36
      $region35: #{tpu_custom_call.1} parent=5 // pred_region
        %s204 = ssub.s32 %s17, 1
        %s205 = sand.u32 %s30, 1
        %s206 = scalar_lea.sflag [#allocation3], %s205
        %s207 = sand.u32 %s30, 1
        %s208 = smul.addr %s207, 8
        %s209 = scalar_lea.vmem [#allocation2], %s208
        // Predicated region
        $region37: #{tpu_custom_call.1} parent=35 // pred_check
          %p210 = pneg %p43
        $region38: #{tpu_custom_call.1} parent=35 // pred_check_branch
          %212 = sbr.rel (%p210) target = $region40
        $region39: #{tpu_custom_call.1} parent=35 // pred_region
          %213 = dma.done %s206, 128
        $region40: #{tpu_custom_call.1} parent=35 // pred_fallthru
          _
        // Predicated region
        $region41: #{tpu_custom_call.1} parent=35 // pred_check
          %p214 = pneg %p64
        $region42: #{tpu_custom_call.1} parent=35 // pred_check_branch
          %216 = sbr.rel (%p214) target = $region44
        $region43: #{tpu_custom_call.1} parent=35 // pred_region
          %217 = dma.done [#allocation6], 512
        $region44: #{tpu_custom_call.1} parent=35 // pred_fallthru
          _
        // Predicated region
        $region45: #{tpu_custom_call.1} parent=35 // pred_check
          %p218 = pneg %p85
        $region46: #{tpu_custom_call.1} parent=35 // pred_check_branch
          %220 = sbr.rel (%p218) target = $region48
        $region47: #{tpu_custom_call.1} parent=35 // pred_region
          %221 = dma.done [#allocation6], 512
        $region48: #{tpu_custom_call.1} parent=35 // pred_fallthru
          _
        %s222 = sand.u32 %s30, 1
        %s223 = scalar_lea.sflag [#allocation3], %s222
        %s224 = sand.u32 %s30, 1
        %s225 = smul.addr %s224, 8
        %s226 = scalar_lea.vmem [#allocation2], %s225
        %p227 = pneg %p43
        %p228 = pneg %p40
        %p229 = pneg %p64
        %p230 = pneg %p61
        %p231 = pneg %p85
        %p232 = pneg %p82
        %p233 = pneg %p106
        %p234 = pneg %p103
        %p235 = pneg %p132
        %p236 = pneg %p129
        %s237 = sand.u32 %s119, 1
        %s238 = scalar_lea.sflag [#allocation4], %s237
        %s239 = sand.u32 %s119, 1
        %s240 = smul.addr %s239, 8
        %s241 = scalar_lea.vmem [#allocation8], %s240
        %v242 = vld [vmem:[%s209] sm:$0xff]
        %v243 = vld [vmem:[#allocation5] sm:$0xff]
        %v244 = vld [vmem:[#allocation5 + $0x8] sm:$0xff]
        %v245 = vld [vmem:[#allocation5 + $0x10] sm:$0xff]
        %v246 = vld [vmem:[#allocation5 + $0x18] sm:$0xff]
        %vm247 = vcmask 261120
        %v249 = vsel %vm247, %v242, 0
        %251 = vmatprep.subr.mxu0 0.0
        %252 = vmatpush1.msra.mxu0 %v243
        %253 = vmatprep.subr.mxu0 0.0
        %254 = vmatpush1.msra.mxu0 %v244
        %255 = vmatprep.subr.mxu0 0.0
        %256 = vmatpush1.msra.mxu0 %v245
        %257 = vmatprep.subr.mxu0 0.0
        %258 = vmatpush1.msra.mxu0 %v246
        %259 = vmatprep.subr.mxu0 0.0
        %260 = vmatpush1.msra.mxu0 0.0
        %261 = vmatprep.subr.mxu0 0.0
        %262 = vmatpush1.msra.mxu0 0.0
        %263 = vmatprep.subr.mxu0 0.0
        %264 = vmatpush1.msra.mxu0 0.0
        %265 = vmatprep.subr.mxu0 0.0
        %266 = vmatpush1.msra.mxu0 0.0
        %267 = vmatprep.subr.mxu0 0.0
        %268 = vmatpush1.msra.mxu0 0.0
        %269 = vmatprep.subr.mxu0 0.0
        %270 = vmatpush1.msra.mxu0 0.0
        %271 = vmatprep.subr.mxu0 0.0
        %272 = vmatpush1.msra.mxu0 0.0
        %273 = vmatprep.subr.mxu0 0.0
        %274 = vmatpush1.msra.mxu0 0.0
        %275 = vmatprep.subr.mxu0 0.0
        %276 = vmatpush1.msra.mxu0 0.0
        %277 = vmatprep.subr.mxu0 0.0
        %278 = vmatpush1.msra.mxu0 0.0
        %279 = vmatprep.subr.mxu0 0.0
        %280 = vmatpush1.msra.mxu0 0.0
        %281 = vmatprep.subr.mxu0 0.0
        %282 = vmatpush1.msra.mxu0 0.0
        %283 = vmatprep.subr.mxu0 0.0
        %284 = vmatpush1.msra.mxu0 0.0
        %285 = vmatprep.subr.mxu0 0.0
        %286 = vmatpush1.msra.mxu0 0.0
        %287 = vmatprep.subr.mxu0 0.0
        %288 = vmatpush1.msra.mxu0 0.0
        %289 = vmatprep.subr.mxu0 0.0
        %290 = vmatpush1.msra.mxu0 0.0
        %291 = vmatprep.subr.mxu0 0.0
        %292 = vmatpush1.msra.mxu0 0.0
        %293 = vmatprep.subr.mxu0 0.0
        %294 = vmatpush1.msra.mxu0 0.0
        %295 = vmatprep.subr.mxu0 0.0
        %296 = vmatpush1.msra.mxu0 0.0
        %297 = vmatprep.subr.mxu0 0.0
        %298 = vmatpush1.msra.mxu0 0.0
        %299 = vmatprep.subr.mxu0 0.0
        %300 = vmatpush1.msra.mxu0 0.0
        %301 = vmatprep.subr.mxu0 0.0
        %302 = vmatpush1.msra.mxu0 0.0
        %303 = vmatprep.subr.mxu0 0.0
        %304 = vmatpush1.msra.mxu0 0.0
        %305 = vmatprep.subr.mxu0 0.0
        %306 = vmatpush1.msra.mxu0 0.0
        %307 = vmatprep.subr.mxu0 0.0
        %308 = vmatpush1.msra.mxu0 0.0
        %309 = vmatprep.subr.mxu0 0.0
        %310 = vmatpush1.msra.mxu0 0.0
        %311 = vmatprep.subr.mxu0 0.0
        %312 = vmatpush1.msra.mxu0 0.0
        %313 = vmatprep.subr.mxu0 0.0
        %314 = vmatpush1.msra.mxu0 0.0
        %315 = vmatprep.mubr.f32.mxu0 0.0
        %316 = vmatmul.mubr.f32.gmra.mrb[0].mxu0 %v249
        %v317 = vpop.f32.mrb[0].mxu0
        %v318 = vadd.f32 0.0, %v317
        %v319 = vpop.f32.mrb[0].mxu0
        %320 = vdwg.mxu0
        %v321 = vmul.f32 %v318, 0.35355338
        %v322 = vlaneseq
        %v323 = vand.u32 %v322, 127
        %vm324 = vcmp.ge.s32.totalorder %v323, 0
        %vm325 = vcmp.ge.s32.totalorder %v323, 8
        %vm326 = vcmp.ge.s32.totalorder %v323, 16
        %vm327 = vcmp.ge.s32.totalorder %v323, 24
        %vm328 = vcmp.lt.s32.totalorder %v323, 8
        %vm329 = vcmp.lt.s32.totalorder %v323, 16
        %vm330 = vcmp.lt.s32.totalorder %v323, 24
        %vm331 = vcmp.lt.s32.totalorder %v323, 32
        %vm332 = vmand %vm324, %vm328
        %vm333 = vmand %vm325, %vm329
        %vm334 = vmand %vm326, %vm330
        %vm335 = vmand %vm327, %vm331
        %v336 = vsel %vm332, 1, 0
        %v337 = vsel %vm333, 1, 0
        %v338 = vsel %vm334, 1, 0
        %v339 = vsel %vm335, 1, 0
        %v340 = vcvt.s32.f32 %v336
        %v341 = vcvt.s32.f32 %v337
        %v342 = vcvt.s32.f32 %v338
        %v343 = vcvt.s32.f32 %v339
        %v344 = vmul.f32 %v340, %v321
        %v345 = vmul.f32 %v341, %v321
        %v346 = vmul.f32 %v342, %v321
        %v347 = vmul.f32 %v343, %v321
        %349 = vrot.lane.b32.xlu0 %v318, 96
        %v350 = vpop.permute.xlu0 %349
        %v352 = vsel %vm247, %v344, 0
        %v355 = vsel %vm247, %v345, 0
        %v358 = vsel %vm247, %v346, 0
        %v361 = vsel %vm247, %v347, 0
        %v363 = vsel %vm247, %v350, 0
        %365 = vmatprep.subr.mxu0 0.0
        %366 = vmatpush1.xpose.msra.mxu0 %v363
        %367 = vmatprep.subr.mxu0 0.0
        %368 = vmatpush1.xpose.msra.mxu0 0.0
        %369 = vmatprep.subr.mxu0 0.0
        %370 = vmatpush1.xpose.msra.mxu0 0.0
        %371 = vmatprep.subr.mxu0 0.0
        %372 = vmatpush1.xpose.msra.mxu0 0.0
        %373 = vmatprep.subr.mxu0 0.0
        %374 = vmatpush1.xpose.msra.mxu0 0.0
        %375 = vmatprep.subr.mxu0 0.0
        %376 = vmatpush1.xpose.msra.mxu0 0.0
        %377 = vmatprep.subr.mxu0 0.0
        %378 = vmatpush1.xpose.msra.mxu0 0.0
        %379 = vmatprep.subr.mxu0 0.0
        %380 = vmatpush1.xpose.msra.mxu0 0.0
        %381 = vmatprep.subr.mxu0 0.0
        %382 = vmatpush1.xpose.msra.mxu0 0.0
        %383 = vmatprep.subr.mxu0 0.0
        %384 = vmatpush1.xpose.msra.mxu0 0.0
        %385 = vmatprep.subr.mxu0 0.0
        %386 = vmatpush1.xpose.msra.mxu0 0.0
        %387 = vmatprep.subr.mxu0 0.0
        %388 = vmatpush1.xpose.msra.mxu0 0.0
        %389 = vmatprep.subr.mxu0 0.0
        %390 = vmatpush1.xpose.msra.mxu0 0.0
        %391 = vmatprep.subr.mxu0 0.0
        %392 = vmatpush1.xpose.msra.mxu0 0.0
        %393 = vmatprep.subr.mxu0 0.0
        %394 = vmatpush1.xpose.msra.mxu0 0.0
        %395 = vmatprep.subr.mxu0 0.0
        %396 = vmatpush1.xpose.msra.mxu0 0.0
        %397 = vmatprep.subr.mxu0 0.0
        %398 = vmatpush1.xpose.msra.mxu0 0.0
        %399 = vmatprep.subr.mxu0 0.0
        %400 = vmatpush1.xpose.msra.mxu0 0.0
        %401 = vmatprep.subr.mxu0 0.0
        %402 = vmatpush1.xpose.msra.mxu0 0.0
        %403 = vmatprep.subr.mxu0 0.0
        %404 = vmatpush1.xpose.msra.mxu0 0.0
        %405 = vmatprep.subr.mxu0 0.0
        %406 = vmatpush1.xpose.msra.mxu0 0.0
        %407 = vmatprep.subr.mxu0 0.0
        %408 = vmatpush1.xpose.msra.mxu0 0.0
        %409 = vmatprep.subr.mxu0 0.0
        %410 = vmatpush1.xpose.msra.mxu0 0.0
        %411 = vmatprep.subr.mxu0 0.0
        %412 = vmatpush1.xpose.msra.mxu0 0.0
        %413 = vmatprep.subr.mxu0 0.0
        %414 = vmatpush1.xpose.msra.mxu0 0.0
        %415 = vmatprep.subr.mxu0 0.0
        %416 = vmatpush1.xpose.msra.mxu0 0.0
        %417 = vmatprep.subr.mxu0 0.0
        %418 = vmatpush1.xpose.msra.mxu0 0.0
        %419 = vmatprep.subr.mxu0 0.0
        %420 = vmatpush1.xpose.msra.mxu0 0.0
        %421 = vmatprep.subr.mxu0 0.0
        %422 = vmatpush1.xpose.msra.mxu0 0.0
        %423 = vmatprep.subr.mxu0 0.0
        %424 = vmatpush1.xpose.msra.mxu0 0.0
        %425 = vmatprep.subr.mxu0 0.0
        %426 = vmatpush1.xpose.msra.mxu0 0.0
        %427 = vmatprep.subr.mxu0 0.0
        %428 = vmatpush1.xpose.msra.mxu0 0.0
        %429 = vmatprep.mubr.f32.mxu0 0.0
        %430 = vmatmul.mubr.f32.gmra.mrb[0].mxu0 %v352
        %v431 = vpop.f32.mrb[0].mxu0
        %v432 = vadd.f32 0.0, %v431
        %v433 = vpop.f32.mrb[0].mxu0
        %434 = vmatprep.mubr.f32.mxu0 0.0
        %435 = vmatmul.mubr.f32.gmra.mrb[0].mxu0 %v355
        %v436 = vpop.f32.mrb[0].mxu0
        %v437 = vadd.f32 0.0, %v436
        %v438 = vpop.f32.mrb[0].mxu0
        %439 = vmatprep.mubr.f32.mxu0 0.0
        %440 = vmatmul.mubr.f32.gmra.mrb[0].mxu0 %v358
        %v441 = vpop.f32.mrb[0].mxu0
        %v442 = vadd.f32 0.0, %v441
        %v443 = vpop.f32.mrb[0].mxu0
        %444 = vmatprep.mubr.f32.mxu0 0.0
        %445 = vmatmul.mubr.f32.gmra.mrb[0].mxu0 %v361
        %v446 = vpop.f32.mrb[0].mxu0
        %v447 = vadd.f32 0.0, %v446
        %v448 = vpop.f32.mrb[0].mxu0
        %449 = vdwg.mxu0
        %vm450 = vcmask 64512
        %v451 = vsel %vm450, %v432, -inf
        %452 = vmax.xlane.f32.xlu0 %v451
        %v453 = vpop.xlane.xlu0 %452
        %v454 = vsel %vm450, %v437, -inf
        %455 = vmax.xlane.f32.xlu0 %v454
        %v456 = vpop.xlane.xlu0 %455
        %v457 = vsel %vm450, %v442, -inf
        %458 = vmax.xlane.f32.xlu0 %v457
        %v459 = vpop.xlane.xlu0 %458
        %v460 = vsel %vm450, %v447, -inf
        %461 = vmax.xlane.f32.xlu0 %v460
        %v462 = vpop.xlane.xlu0 %461
        %v463 = vsub.f32 %v432, %v453
        %v464 = vsub.f32 %v437, %v456
        %v465 = vsub.f32 %v442, %v459
        %v466 = vsub.f32 %v447, %v462
        %v467 = vmul.f32 %v463, 1.442695
        %v468 = vpow.pop %v467
        %v469 = vmul.f32 %v464, 1.442695
        %v470 = vpow.pop %v469
        %v471 = vmul.f32 %v465, 1.442695
        %v472 = vpow.pop %v471
        %v473 = vmul.f32 %v466, 1.442695
        %v474 = vpow.pop %v473
        %v475 = vsel %vm450, %v468, 0.0
        %476 = vadd.xlane.f32.xlu0 %v475
        %v477 = vpop.xlane.xlu0 %476
        %v478 = vsel %vm450, %v470, 0.0
        %479 = vadd.xlane.f32.xlu0 %v478
        %v480 = vpop.xlane.xlu0 %479
        %v481 = vsel %vm450, %v472, 0.0
        %482 = vadd.xlane.f32.xlu0 %v481
        %v483 = vpop.xlane.xlu0 %482
        %v484 = vsel %vm450, %v474, 0.0
        %485 = vadd.xlane.f32.xlu0 %v484
        %v486 = vpop.xlane.xlu0 %485
        %v487 = vrcp.pop %v477
        %v488 = vrcp.pop %v480
        %v489 = vrcp.pop %v483
        %v490 = vrcp.pop %v486
        %v491 = vmul.f32 %v468, %v487
        %v492 = vmul.f32 %v470, %v488
        %v493 = vmul.f32 %v472, %v489
        %v494 = vmul.f32 %v474, %v490
        %495 = vrot.lane.b32.xlu0 %v318, 64
        %v496 = vpop.permute.xlu0 %495
        %v499 = vsel %vm450, %v491, 0
        %v502 = vsel %vm450, %v492, 0
        %v505 = vsel %vm450, %v493, 0
        %v508 = vsel %vm450, %v494, 0
        %510 = vmatprep.subr.mxu0 0.0
        %511 = vmatpush1.msra.mxu0 %v496
        %512 = vmatprep.subr.mxu0 0.0
        %513 = vmatpush1.msra.mxu0 0.0
        %514 = vmatprep.subr.mxu0 0.0
        %515 = vmatpush1.msra.mxu0 0.0
        %516 = vmatprep.subr.mxu0 0.0
        %517 = vmatpush1.msra.mxu0 0.0
        %518 = vmatprep.subr.mxu0 0.0
        %519 = vmatpush1.msra.mxu0 0.0
        %520 = vmatprep.subr.mxu0 0.0
        %521 = vmatpush1.msra.mxu0 0.0
        %522 = vmatprep.subr.mxu0 0.0
        %523 = vmatpush1.msra.mxu0 0.0
        %524 = vmatprep.subr.mxu0 0.0
        %525 = vmatpush1.msra.mxu0 0.0
        %526 = vmatprep.subr.mxu0 0.0
        %527 = vmatpush1.msra.mxu0 0.0
        %528 = vmatprep.subr.mxu0 0.0
        %529 = vmatpush1.msra.mxu0 0.0
        %530 = vmatprep.subr.mxu0 0.0
        %531 = vmatpush1.msra.mxu0 0.0
        %532 = vmatprep.subr.mxu0 0.0
        %533 = vmatpush1.msra.mxu0 0.0
        %534 = vmatprep.subr.mxu0 0.0
        %535 = vmatpush1.msra.mxu0 0.0
        %536 = vmatprep.subr.mxu0 0.0
        %537 = vmatpush1.msra.mxu0 0.0
        %538 = vmatprep.subr.mxu0 0.0
        %539 = vmatpush1.msra.mxu0 0.0
        %540 = vmatprep.subr.mxu0 0.0
        %541 = vmatpush1.msra.mxu0 0.0
        %542 = vmatprep.subr.mxu0 0.0
        %543 = vmatpush1.msra.mxu0 0.0
        %544 = vmatprep.subr.mxu0 0.0
        %545 = vmatpush1.msra.mxu0 0.0
        %546 = vmatprep.subr.mxu0 0.0
        %547 = vmatpush1.msra.mxu0 0.0
        %548 = vmatprep.subr.mxu0 0.0
        %549 = vmatpush1.msra.mxu0 0.0
        %550 = vmatprep.subr.mxu0 0.0
        %551 = vmatpush1.msra.mxu0 0.0
        %552 = vmatprep.subr.mxu0 0.0
        %553 = vmatpush1.msra.mxu0 0.0
        %554 = vmatprep.subr.mxu0 0.0
        %555 = vmatpush1.msra.mxu0 0.0
        %556 = vmatprep.subr.mxu0 0.0
        %557 = vmatpush1.msra.mxu0 0.0
        %558 = vmatprep.subr.mxu0 0.0
        %559 = vmatpush1.msra.mxu0 0.0
        %560 = vmatprep.subr.mxu0 0.0
        %561 = vmatpush1.msra.mxu0 0.0
        %562 = vmatprep.subr.mxu0 0.0
        %563 = vmatpush1.msra.mxu0 0.0
        %564 = vmatprep.subr.mxu0 0.0
        %565 = vmatpush1.msra.mxu0 0.0
        %566 = vmatprep.subr.mxu0 0.0
        %567 = vmatpush1.msra.mxu0 0.0
        %568 = vmatprep.subr.mxu0 0.0
        %569 = vmatpush1.msra.mxu0 0.0
        %570 = vmatprep.subr.mxu0 0.0
        %571 = vmatpush1.msra.mxu0 0.0
        %572 = vmatprep.subr.mxu0 0.0
        %573 = vmatpush1.msra.mxu0 0.0
        %574 = vmatprep.mubr.f32.mxu0 0.0
        %575 = vmatmul.mubr.f32.gmra.mrb[0].mxu0 %v499
        %v576 = vpop.f32.mrb[0].mxu0
        %v577 = vadd.f32 0.0, %v576
        %v578 = vpop.f32.mrb[0].mxu0
        %579 = vmatprep.mubr.f32.mxu0 0.0
        %580 = vmatmul.mubr.f32.gmra.mrb[0].mxu0 %v502
        %v581 = vpop.f32.mrb[0].mxu0
        %v582 = vadd.f32 0.0, %v581
        %v583 = vpop.f32.mrb[0].mxu0
        %584 = vmatprep.mubr.f32.mxu0 0.0
        %585 = vmatmul.mubr.f32.gmra.mrb[0].mxu0 %v505
        %v586 = vpop.f32.mrb[0].mxu0
        %v587 = vadd.f32 0.0, %v586
        %v588 = vpop.f32.mrb[0].mxu0
        %589 = vmatprep.mubr.f32.mxu0 0.0
        %590 = vmatmul.mubr.f32.gmra.mrb[0].mxu0 %v508
        %v591 = vpop.f32.mrb[0].mxu0
        %v592 = vadd.f32 0.0, %v591
        %v593 = vpop.f32.mrb[0].mxu0
        %594 = vdwg.mxu0
        %v595 = vmul.f32 %v577, %v340
        %v596 = vmul.f32 %v582, %v341
        %v597 = vmul.f32 %v587, %v342
        %v598 = vmul.f32 %v592, %v343
        %v599 = vsel %vm247, %v595, 0.0
        %v600 = vsel %vm247, %v596, 0.0
        %v601 = vadd.f32 %v599, %v600
        %v602 = vsel %vm247, %v597, 0.0
        %v603 = vadd.f32 %v601, %v602
        %v604 = vsel %vm247, %v598, 0.0
        %v605 = vadd.f32 %v603, %v604
        %v606 = vld [vmem:[#allocation7] sm:$0xff]
        %v607 = vld [vmem:[#allocation7 + $0x8] sm:$0xff]
        %v608 = vld [vmem:[#allocation7 + $0x10] sm:$0xff]
        %v609 = vld [vmem:[#allocation7 + $0x18] sm:$0xff]
        %v610 = vld [vmem:[%s3] sm:$0x1]
        %v612 = vlaneseq
        %v613 = vshrl.u32 %v612, 7
        %v614 = vsub.s32 0, %v613
        %v615 = vrot.slane %v610, %v614
        %v618 = vsel %vm247, %v605, 0
        %620 = vmatprep.subr.mxu0 0.0
        %621 = vmatpush1.msra.mxu0 %v606
        %622 = vmatprep.subr.mxu0 0.0
        %623 = vmatpush1.msra.mxu0 %v607
        %624 = vmatprep.subr.mxu0 0.0
        %625 = vmatpush1.msra.mxu0 %v608
        %626 = vmatprep.subr.mxu0 0.0
        %627 = vmatpush1.msra.mxu0 %v609
        %628 = vmatprep.subr.mxu0 0.0
        %629 = vmatpush1.msra.mxu0 0.0
        %630 = vmatprep.subr.mxu0 0.0
        %631 = vmatpush1.msra.mxu0 0.0
        %632 = vmatprep.subr.mxu0 0.0
        %633 = vmatpush1.msra.mxu0 0.0
        %634 = vmatprep.subr.mxu0 0.0
        %635 = vmatpush1.msra.mxu0 0.0
        %636 = vmatprep.subr.mxu0 0.0
        %637 = vmatpush1.msra.mxu0 0.0
        %638 = vmatprep.subr.mxu0 0.0
        %639 = vmatpush1.msra.mxu0 0.0
        %640 = vmatprep.subr.mxu0 0.0
        %641 = vmatpush1.msra.mxu0 0.0
        %642 = vmatprep.subr.mxu0 0.0
        %643 = vmatpush1.msra.mxu0 0.0
        %644 = vmatprep.subr.mxu0 0.0
        %645 = vmatpush1.msra.mxu0 0.0
        %646 = vmatprep.subr.mxu0 0.0
        %647 = vmatpush1.msra.mxu0 0.0
        %648 = vmatprep.subr.mxu0 0.0
        %649 = vmatpush1.msra.mxu0 0.0
        %650 = vmatprep.subr.mxu0 0.0
        %651 = vmatpush1.msra.mxu0 0.0
        %652 = vmatprep.subr.mxu0 0.0
        %653 = vmatpush1.msra.mxu0 0.0
        %654 = vmatprep.subr.mxu0 0.0
        %655 = vmatpush1.msra.mxu0 0.0
        %656 = vmatprep.subr.mxu0 0.0
        %657 = vmatpush1.msra.mxu0 0.0
        %658 = vmatprep.subr.mxu0 0.0
        %659 = vmatpush1.msra.mxu0 0.0
        %660 = vmatprep.subr.mxu0 0.0
        %661 = vmatpush1.msra.mxu0 0.0
        %662 = vmatprep.subr.mxu0 0.0
        %663 = vmatpush1.msra.mxu0 0.0
        %664 = vmatprep.subr.mxu0 0.0
        %665 = vmatpush1.msra.mxu0 0.0
        %666 = vmatprep.subr.mxu0 0.0
        %667 = vmatpush1.msra.mxu0 0.0
        %668 = vmatprep.subr.mxu0 0.0
        %669 = vmatpush1.msra.mxu0 0.0
        %670 = vmatprep.subr.mxu0 0.0
        %671 = vmatpush1.msra.mxu0 0.0
        %672 = vmatprep.subr.mxu0 0.0
        %673 = vmatpush1.msra.mxu0 0.0
        %674 = vmatprep.subr.mxu0 0.0
        %675 = vmatpush1.msra.mxu0 0.0
        %676 = vmatprep.subr.mxu0 0.0
        %677 = vmatpush1.msra.mxu0 0.0
        %678 = vmatprep.subr.mxu0 0.0
        %679 = vmatpush1.msra.mxu0 0.0
        %680 = vmatprep.subr.mxu0 0.0
        %681 = vmatpush1.msra.mxu0 0.0
        %682 = vmatprep.subr.mxu0 0.0
        %683 = vmatpush1.msra.mxu0 0.0
        %684 = vmatprep.mubr.f32.mxu0 0.0
        %685 = vmatmul.mubr.f32.gmra.mrb[0].mxu0 %v618
        %v686 = vpop.f32.mrb[0].mxu0
        %v687 = vadd.f32 %v615, %v686
        %v688 = vpop.f32.mrb[0].mxu0
        %689 = vdwg.mxu0
        %690 = vst.msk [vmem:[%s241] sm:$0xff] %vm247, %v687
        %s691 = sand.u32 %s119, 1
        %s692 = scalar_lea.sflag [#allocation4], %s691
        %s693 = sand.u32 %s119, 1
        %s694 = smul.addr %s693, 8
        %s695 = scalar_lea.vmem [#allocation8], %s694
        // Predicated region
        $region49: #{tpu_custom_call.1} parent=35 // pred_check
          %p696 = pneg %p129
        $region50: #{tpu_custom_call.1} parent=35 // pred_check_branch
          %698 = sbr.rel (%p696) target = $region52
        $region51: #{tpu_custom_call.1} parent=35 // pred_region
          %s700 = ssub.s32 128, 128
          %701 = vsyncadd %s692, %s700
          %s702 = smul.addr %s22, 128
          %s703 = scalar_lea.hbm %s4, %s702
          %s705 = sshll.u32 %s695, 4
          %s706 = int_to_ptr.vmem [resolvable:$true] %s705
          %708 = dma.vmem_to_hbm [thread:$0]  %s706, 128, %s703, %s692
        $region52: #{tpu_custom_call.1} parent=35 // pred_fallthru
          _
      $region36: #{tpu_custom_call.1} parent=5 // pred_fallthru
        _
      %p709 = scmp.le.s32.totalorder 2, %s17
      // Predicated region
      $region53: #{tpu_custom_call.1} parent=5 // pred_check
        %p710 = pneg %p709
      $region54: #{tpu_custom_call.1} parent=5 // pred_check_branch
        %712 = sbr.rel (%p710) target = $region56
      $region55: #{tpu_custom_call.1} parent=5 // pred_region
        %s713 = ssub.s32 %s17, 2
        // Predicated region
        $region57: #{tpu_custom_call.1} parent=55 // pred_check
          %p714 = pneg %p135
        $region58: #{tpu_custom_call.1} parent=55 // pred_check_branch
          %716 = sbr.rel (%p714) target = $region60
        $region59: #{tpu_custom_call.1} parent=55 // pred_region
          %s717 = sand.u32 %s120, 1
          %s718 = scalar_lea.sflag [#allocation4], %s717
          %s719 = sand.u32 %s120, 1
          %s720 = smul.addr %s719, 8
          %s721 = scalar_lea.vmem [#allocation8], %s720
          %722 = dma.done %s718, 128
        $region60: #{tpu_custom_call.1} parent=55 // pred_fallthru
          _
      $region56: #{tpu_custom_call.1} parent=5 // pred_fallthru
        _
    $region6: #{tpu_custom_call.1} parent=1 // loop_footer
      %s21 = sadd.s32 1, %s17
    $region7: #{tpu_custom_call.1} parent=1 // loop_footer_branch
      %16 = sbr.rel target = $region3
    $region8: #{tpu_custom_call.1} parent=1 // loop_exit
      _
    %723 = vsyncpa [#allocation3], 1
    %s724 = scalar_lea.sflag [#allocation3], 1
    %725 = vsyncpa %s724, 1
    %726 = vsyncpa [#allocation6], 1
    %727 = vsyncpa [#allocation4], 1
    %s728 = scalar_lea.sflag [#allocation4], 1
    %729 = vsyncpa %s728, 1

</llo_original>
